<compile_context>
chip_gen: v6e
topology: v6e:2x2x1
jax: 0.10.0
libtpu: 0.0.40
codegen_flags: <defaults>
</compile_context>

<pallas_src>
import jax
import jax.numpy as jnp
import numpy as np
from jax.experimental import pallas as pl
from jax.experimental.pallas import tpu as pltpu

_F_PAD = 128  # all feature dims padded to one lane-dense width


def _round_up(v, m):
    return ((v + m - 1) // m) * m


def _tile_plan(n):
    """(tm, tk, n_pad): row tile, contraction tile, padded node count."""
    if n < 256:
        tm = _round_up(max(n, 1), 8)
        return tm, tm, tm
    tm = 256
    n_pad = _round_up(n, tm)
    tk = tm
    for cand in (2048, 1024, 512):
        if n_pad % cand == 0:
            tk = cand
            break
    return tm, tk, n_pad


def _vmem_limit_bytes():
    """~75% of physical VMEM: ≈48 MiB on v7x, capped at 96 MiB on v5e/v6e."""
    cap = 128 * 1024 * 1024
    try:
        info = pltpu.get_tpu_info()
        cap = int(getattr(info, "vmem_capacity_bytes", cap))
    except Exception:
        pass
    return max(32 * 1024 * 1024, min(96 * 1024 * 1024, (cap * 3) // 4))


# ----------------------------------------------------------------------------
# Kernel 1: one GraphConv layer (+ ReLU), row-tiled over nodes, K-tiled over
# the aggregation contraction:
#   out_rows = relu( (A_rows @ h) @ Wrel_T + h_rows @ Wroot_T + b )
# ----------------------------------------------------------------------------
def _graph_conv_kernel(a_ref, hk_ref, hr_ref, wr_ref, ws_ref, b_ref,
                       o_ref, acc_ref):
    kk = pl.program_id(1)

    @pl.when(kk == 0)
    def _():
        acc_ref[...] = jnp.zeros_like(acc_ref)

    # Aggregation partial: bf16 x bf16 -> f32 accumulate (memory-bound on A).
    acc_ref[...] += jnp.dot(a_ref[...], hk_ref[...],
                            preferred_element_type=jnp.float32)

    @pl.when(kk == pl.num_programs(1) - 1)
    def _():
        # Two lane-aligned 128-K MXU dots (no concat relayout).
        z = jnp.dot(acc_ref[...], wr_ref[...],
                    preferred_element_type=jnp.float32)
        z = z + jnp.dot(hr_ref[...].astype(jnp.float32), ws_ref[...],
                        preferred_element_type=jnp.float32)
        z = z + b_ref[...]
        o_ref[...] = jnp.maximum(z, 0.0).astype(o_ref.dtype)


def graph_conv_layer(adj_bf16, h_bf16, w_rel, w_root, bias, *, tm, tk,
                     out_dtype):
    n_pad = adj_bf16.shape[0]
    f = h_bf16.shape[1]  # == _F_PAD
    return pl.pallas_call(
        _graph_conv_kernel,
        out_shape=jax.ShapeDtypeStruct((n_pad, f), out_dtype),
        grid=(n_pad // tm, n_pad // tk),
        in_specs=[
            pl.BlockSpec((tm, tk), lambda i, k: (i, k)),    # A block (bf16)
            pl.BlockSpec((tk, f), lambda i, k: (k, 0)),     # h K-slice (bf16)
            pl.BlockSpec((tm, f), lambda i, k: (i, 0)),     # h row slice (root)
            pl.BlockSpec((f, f), lambda i, k: (0, 0)),      # Wrel^T (padded)
            pl.BlockSpec((f, f), lambda i, k: (0, 0)),      # Wroot^T (padded)
            pl.BlockSpec((1, f), lambda i, k: (0, 0)),      # bias (padded)
        ],
        out_specs=pl.BlockSpec((tm, f), lambda i, k: (i, 0)),
        scratch_shapes=[pltpu.VMEM((tm, f), jnp.float32)],
        compiler_params=pltpu.CompilerParams(
            dimension_semantics=("parallel", "arbitrary"),
            vmem_limit_bytes=_vmem_limit_bytes(),
        ),
    )(adj_bf16, h_bf16, h_bf16, w_rel, w_root, bias)


# ----------------------------------------------------------------------------
# Kernel 2: head = lin1 + global_mean_pool + lin2, accumulated over row tiles.
# lin1 bias is added per-node before pooling (exact for empty graphs too).
# ----------------------------------------------------------------------------
def _head_kernel(h_ref, p_ref, wl1_ref, bl1_ref, wl2_ref, bl2_ref,
                 o_ref, acc_ref):
    @pl.when(pl.program_id(0) == 0)
    def _():
        acc_ref[...] = jnp.zeros_like(acc_ref)

    z = jnp.dot(h_ref[...], wl1_ref[...],
                preferred_element_type=jnp.float32) + bl1_ref[...]
    acc_ref[...] += jnp.dot(p_ref[...], z, preferred_element_type=jnp.float32)

    @pl.when(pl.program_id(0) == pl.num_programs(0) - 1)
    def _():
        o_ref[...] = (jnp.dot(acc_ref[...], wl2_ref[...],
                              preferred_element_type=jnp.float32)
                      + bl2_ref[...])


def head_layer(h4, pool, wl1_t, bl1, wl2_t, bl2, *, tm):
    n_pad, f = h4.shape
    g_pad = pool.shape[0]
    hid = wl1_t.shape[1]
    c_pad = wl2_t.shape[1]
    return pl.pallas_call(
        _head_kernel,
        out_shape=jax.ShapeDtypeStruct((g_pad, c_pad), jnp.float32),
        grid=(n_pad // tm,),
        in_specs=[
            pl.BlockSpec((tm, f), lambda i: (i, 0)),        # h4 row block (f32)
            pl.BlockSpec((g_pad, tm), lambda i: (0, i)),    # pool column block
            pl.BlockSpec((f, hid), lambda i: (0, 0)),       # lin1 W^T (padded)
            pl.BlockSpec((1, hid), lambda i: (0, 0)),       # lin1 b (padded)
            pl.BlockSpec((hid, c_pad), lambda i: (0, 0)),   # lin2 W^T (padded)
            pl.BlockSpec((1, c_pad), lambda i: (0, 0)),     # lin2 b (padded)
        ],
        out_specs=pl.BlockSpec((g_pad, c_pad), lambda i: (0, 0)),
        scratch_shapes=[pltpu.VMEM((g_pad, hid), jnp.float32)],
        compiler_params=pltpu.CompilerParams(
            dimension_semantics=("arbitrary",),
            vmem_limit_bytes=_vmem_limit_bytes(),
        ),
    )(h4, pool, wl1_t, bl1, wl2_t, bl2)


# ----------------------------------------------------------------------------
# Wrapper: XLA glue (densify edge_index / batch, pad, call kernels, slice).
# ----------------------------------------------------------------------------
def gnn_forward(x, edge_index, batch, num_graphs, num_classes, params):
    n = x.shape[0]
    tm, tk, n_pad = _tile_plan(n)
    g_pad = _round_up(max(num_graphs, 1), 8)

    src, dst = edge_index[0], edge_index[1]
    # Dense adjacency A[i, j] = #edges j -> i, built directly in bf16
    # (edge multiplicities exact in bf16 up to 256).
    adj = jnp.zeros((n_pad, n_pad), jnp.bfloat16).at[dst, src].add(
        jnp.ones(src.shape, jnp.bfloat16))

    # Mean-pool matrix P[g, n] = 1/|graph g| iff batch[n] == g (f32, small).
    counts = jnp.zeros((num_graphs,), jnp.float32).at[batch].add(1.0)
    counts = jnp.maximum(counts, 1.0)
    pool = jnp.zeros((g_pad, n_pad), jnp.float32)
    pool = pool.at[batch, jnp.arange(n)].set(1.0 / counts[batch])

    # Node features padded to (n_pad, 128); single bf16 cast of the input
    # (inter-layer h stays bf16, produced directly by the kernels).
    x_pad = jnp.zeros((n_pad, _F_PAD), jnp.float32).at[:n, :x.shape[1]].set(x)
    h = x_pad.astype(jnp.bfloat16)

    for li in (1, 2, 3):
        h = graph_conv_layer(adj, h, params[f"wr{li}"], params[f"ws{li}"],
                             params[f"b{li}"], tm=tm, tk=tk,
                             out_dtype=jnp.bfloat16)
    # Layer-4 output feeds the head: keep it f32.
    h4 = graph_conv_layer(adj, h, params["wr4"], params["ws4"], params["b4"],
                          tm=tm, tk=tk, out_dtype=jnp.float32)

    out = head_layer(h4, pool, params["wl1_t"], params["bl1"],
                     params["wl2_t"], params["bl2"], tm=tm)
    return out[:num_graphs, :num_classes].reshape(-1)


# ----------------------------------------------------------------------------
# Pure-JAX f32 reference (PyTorch semantics) for correctness.
# ----------------------------------------------------------------------------
def gnn_reference(x, edge_index, batch, num_graphs, raw):
    n = x.shape[0]
    src, dst = edge_index[0], edge_index[1]
    adj = jnp.zeros((n, n), jnp.float32).at[dst, src].add(1.0)
    counts = jnp.zeros((num_graphs,), jnp.float32).at[batch].add(1.0)
    counts = jnp.maximum(counts, 1.0)
    pool = (batch[None, :] == jnp.arange(num_graphs)[:, None]).astype(jnp.float32)
    pool = pool / counts[:, None]

    def conv(h, wr, ws, b):
        return (adj @ h) @ wr.T + b + h @ ws.T

    h = jax.nn.relu(conv(x, raw["w1r"], raw["w1s"], raw["b1"]))
    h = jax.nn.relu(conv(h, raw["w2r"], raw["w2s"], raw["b2"]))
    h = jax.nn.relu(conv(h, raw["w3r"], raw["w3s"], raw["b3"]))
    h = jax.nn.relu(conv(h, raw["w4r"], raw["w4s"], raw["b4"]))
    h = h @ raw["wl1"].T + raw["bl1"]
    pooled = pool @ h
    out = pooled @ raw["wl2"].T + raw["bl2"]
    return out.reshape(-1)


# ----------------------------------------------------------------------------
# Parameter init (PyTorch layout) + kernel-layout preparation.
# ----------------------------------------------------------------------------
def init_params(key, num_features, num_classes):
    dims = [(num_features, 16), (16, 32), (32, 64), (64, 128)]
    params = {}
    keys = jax.random.split(key, 4 * 3 + 4)
    ki = 0
    for li, (fin, fout) in enumerate(dims, start=1):
        scale = 1.0 / np.sqrt(fin)
        params[f"w{li}r"] = jax.random.uniform(keys[ki], (fout, fin), jnp.float32, -scale, scale); ki += 1
        params[f"w{li}s"] = jax.random.uniform(keys[ki], (fout, fin), jnp.float32, -scale, scale); ki += 1
        params[f"b{li}"] = jax.random.uniform(keys[ki], (1, fout), jnp.float32, -scale, scale); ki += 1
    s1 = 1.0 / np.sqrt(128)
    params["wl1"] = jax.random.uniform(keys[ki], (64, 128), jnp.float32, -s1, s1); ki += 1
    params["bl1"] = jax.random.uniform(keys[ki], (1, 64), jnp.float32, -s1, s1); ki += 1
    s2 = 1.0 / np.sqrt(64)
    params["wl2"] = jax.random.uniform(keys[ki], (num_classes, 64), jnp.float32, -s2, s2); ki += 1
    params["bl2"] = jax.random.uniform(keys[ki], (1, num_classes), jnp.float32, -s2, s2); ki += 1
    return params


def _pad2(a, rows, cols):
    out = jnp.zeros((rows, cols), jnp.float32)
    return out.at[:a.shape[0], :a.shape[1]].set(a)


def prepare_params(raw, num_classes):
    """Pre-transpose and zero-pad every weight/bias to 128-lane-dense shapes."""
    p = {}
    for li in (1, 2, 3, 4):
        p[f"wr{li}"] = _pad2(raw[f"w{li}r"].T, _F_PAD, _F_PAD)   # (128, 128)
        p[f"ws{li}"] = _pad2(raw[f"w{li}s"].T, _F_PAD, _F_PAD)   # (128, 128)
        p[f"b{li}"] = _pad2(raw[f"b{li}"], 1, _F_PAD)            # (1, 128)
    p["wl1_t"] = _pad2(raw["wl1"].T, _F_PAD, _F_PAD)             # (128, 128)
    p["bl1"] = _pad2(raw["bl1"], 1, _F_PAD)                      # (1, 128)
    p["wl2_t"] = _pad2(raw["wl2"].T, _F_PAD, _F_PAD)             # (128, 128)
    p["bl2"] = _pad2(raw["bl2"], 1, _F_PAD)                      # (1, 128)
    return p


if __name__ == "__main__":
    num_features = 4
    num_classes = 3
    num_nodes = 8
    num_graphs = 2

    key = jax.random.PRNGKey(0)
    kx, kp = jax.random.split(key)

    x = jax.random.normal(kx, (num_nodes, num_features), jnp.float32)
    # Two graphs of 4 nodes each, bidirectional chain within each graph.
    src = jnp.array([0, 1, 1, 2, 2, 3, 4, 5, 5, 6, 6, 7], jnp.int32)
    dst = jnp.array([1, 0, 2, 1, 3, 2, 5, 4, 6, 5, 7, 6], jnp.int32)
    edge_index = jnp.stack([src, dst], axis=0)               # [2, E]
    batch = jnp.array([0, 0, 0, 0, 1, 1, 1, 1], jnp.int32)   # node -> graph id

    raw = init_params(kp, num_features, num_classes)
    params = prepare_params(raw, num_classes)

    out = gnn_forward(x, edge_index, batch, num_graphs, num_classes, params)
    out = jax.block_until_ready(out)

    ref = gnn_reference(x, edge_index, batch, num_graphs, raw)
    # Tolerance loosened for the bf16 inter-layer activations (f32 accumulation).
    np.testing.assert_allclose(np.asarray(out), np.asarray(ref), rtol=4e-2, atol=4e-2)

    print("KERNEL_OK")
</pallas_src>

<mosaic_0001>
module attributes {stable_mosaic.version = 11 : i64} {
  func.func @_graph_conv_kernel(%arg0: i32, %arg1: i32, %arg2: memref<8x8xbf16, #tpu.memory_space<vmem>>, %arg3: memref<8x128xbf16, #tpu.memory_space<vmem>>, %arg4: memref<8x128xbf16, #tpu.memory_space<vmem>>, %arg5: memref<128x128xf32, #tpu.memory_space<vmem>>, %arg6: memref<128x128xf32, #tpu.memory_space<vmem>>, %arg7: memref<1x128xf32, #tpu.memory_space<vmem>>, %arg8: memref<8x128xbf16, #tpu.memory_space<vmem>>, %arg9: memref<8x128xf32, #tpu.memory_space<vmem>>) attributes {dimension_semantics = [#tpu.dimension_semantics<parallel>, #tpu.dimension_semantics<arbitrary>], iteration_bounds = array<i64: 1, 1>, scalar_prefetch = 0 : i64, scratch_operands = 1 : i64, tpu.core_type = #tpu.core_type<tc>, window_params = [{transform_indices = @transform_0, window_bounds = array<i64: 8, 8>}, {transform_indices = @transform_1, window_bounds = array<i64: 8, 128>}, {transform_indices = @transform_2, window_bounds = array<i64: 8, 128>}, {pipeline_mode = #tpu.pipeline_mode<synchronous>, transform_indices = @transform_3, window_bounds = array<i64: 128, 128>}, {pipeline_mode = #tpu.pipeline_mode<synchronous>, transform_indices = @transform_4, window_bounds = array<i64: 128, 128>}, {pipeline_mode = #tpu.pipeline_mode<synchronous>, transform_indices = @transform_5, window_bounds = array<i64: 1, 128>}, {transform_indices = @transform_6, window_bounds = array<i64: 8, 128>}]} {
    %c0_i32 = arith.constant 0 : i32
    %0 = arith.cmpi eq, %arg1, %c0_i32 : i32
    %1 = arith.extui %0 : i1 to i32
    %c0_i32_0 = arith.constant 0 : i32
    %2 = arith.cmpi ne, %1, %c0_i32_0 : i32
    scf.if %2 {
      %cst_10 = arith.constant 0.000000e+00 : f32
      %12 = vector.broadcast %cst_10 : f32 to vector<8x128xf32>
      %c0_11 = arith.constant 0 : index
      %c0_12 = arith.constant 0 : index
      %13 = vector.load %arg9[%c0_11, %c0_12] : memref<8x128xf32, #tpu.memory_space<vmem>>, vector<8x128xf32>
      tpu.vector_store %arg9[%c0_11, %c0_12], %12 {strides = array<i32>} : memref<8x128xf32, #tpu.memory_space<vmem>>, vector<8x128xf32>,
    } else {
    }
    %c0 = arith.constant 0 : index
    %c0_1 = arith.constant 0 : index
    %3 = vector.load %arg9[%c0, %c0_1] : memref<8x128xf32, #tpu.memory_space<vmem>>, vector<8x128xf32>
    %c0_2 = arith.constant 0 : index
    %c0_3 = arith.constant 0 : index
    %4 = vector.load %arg2[%c0_2, %c0_3] : memref<8x8xbf16, #tpu.memory_space<vmem>>, vector<8x8xbf16>
    %c0_4 = arith.constant 0 : index
    %c0_5 = arith.constant 0 : index
    %5 = vector.load %arg3[%c0_4, %c0_5] : memref<8x128xbf16, #tpu.memory_space<vmem>>, vector<8x128xbf16>
    %cst = arith.constant dense<0.000000e+00> : vector<8x128xf32>
    %6 = tpu.matmul %4, %5, %cst {dimension_numbers = #tpu.dot_dimension_numbers<[1], [0], [0], [1], [0, 0, 1, 1], [], []>} : vector<8x8xbf16>, vector<8x128xbf16>, vector<8x128xf32> -> vector<8x128xf32>
    %7 = arith.addf %3, %6 : vector<8x128xf32>
    %c0_6 = arith.constant 0 : index
    %c0_7 = arith.constant 0 : index
    %8 = vector.load %arg9[%c0_6, %c0_7] : memref<8x128xf32, #tpu.memory_space<vmem>>, vector<8x128xf32>
    tpu.vector_store %arg9[%c0_6, %c0_7], %7 {strides = array<i32>} : memref<8x128xf32, #tpu.memory_space<vmem>>, vector<8x128xf32>,
    %c0_i32_8 = arith.constant 0 : i32
    %9 = arith.cmpi eq, %arg1, %c0_i32_8 : i32
    %10 = arith.extui %9 : i1 to i32
    %c0_i32_9 = arith.constant 0 : i32
    %11 = arith.cmpi ne, %10, %c0_i32_9 : i32
    scf.if %11 {
      %c0_10 = arith.constant 0 : index
      %c0_11 = arith.constant 0 : index
      %12 = vector.load %arg9[%c0_10, %c0_11] : memref<8x128xf32, #tpu.memory_space<vmem>>, vector<8x128xf32>
      %c0_12 = arith.constant 0 : index
      %c0_13 = arith.constant 0 : index
      %13 = vector.load %arg5[%c0_12, %c0_13] : memref<128x128xf32, #tpu.memory_space<vmem>>, vector<128x128xf32>
      %cst_14 = arith.constant dense<0.000000e+00> : vector<8x128xf32>
      %14 = tpu.matmul %12, %13, %cst_14 {dimension_numbers = #tpu.dot_dimension_numbers<[1], [0], [0], [1], [0, 0, 1, 1], [], []>} : vector<8x128xf32>, vector<128x128xf32>, vector<8x128xf32> -> vector<8x128xf32>
      %c0_15 = arith.constant 0 : index
      %c0_16 = arith.constant 0 : index
      %15 = vector.load %arg4[%c0_15, %c0_16] : memref<8x128xbf16, #tpu.memory_space<vmem>>, vector<8x128xbf16>
      %16 = arith.extf %15 : vector<8x128xbf16> to vector<8x128xf32>
      %c0_17 = arith.constant 0 : index
      %c0_18 = arith.constant 0 : index
      %17 = vector.load %arg6[%c0_17, %c0_18] : memref<128x128xf32, #tpu.memory_space<vmem>>, vector<128x128xf32>
      %cst_19 = arith.constant dense<0.000000e+00> : vector<8x128xf32>
      %18 = tpu.matmul %16, %17, %cst_19 {dimension_numbers = #tpu.dot_dimension_numbers<[1], [0], [0], [1], [0, 0, 1, 1], [], []>} : vector<8x128xf32>, vector<128x128xf32>, vector<8x128xf32> -> vector<8x128xf32>
      %19 = arith.addf %14, %18 : vector<8x128xf32>
      %c0_20 = arith.constant 0 : index
      %c0_21 = arith.constant 0 : index
      %20 = vector.load %arg7[%c0_20, %c0_21] : memref<1x128xf32, #tpu.memory_space<vmem>>, vector<1x128xf32>
      %21 = vector.broadcast %20 : vector<1x128xf32> to vector<8x128xf32>
      %22 = arith.addf %19, %21 : vector<8x128xf32>
      %cst_22 = arith.constant 0.000000e+00 : f32
      %23 = vector.broadcast %cst_22 : f32 to vector<8x128xf32>
      %24 = arith.maximumf %22, %23 : vector<8x128xf32>
      %25 = arith.truncf %24 : vector<8x128xf32> to vector<8x128xbf16>
      %c0_23 = arith.constant 0 : index
      %c0_24 = arith.constant 0 : index
      %26 = vector.load %arg8[%c0_23, %c0_24] : memref<8x128xbf16, #tpu.memory_space<vmem>>, vector<8x128xbf16>
      tpu.vector_store %arg8[%c0_23, %c0_24], %25 {strides = array<i32>} : memref<8x128xbf16, #tpu.memory_space<vmem>>, vector<8x128xbf16>,
    } else {
    }
    return
  }
  func.func @transform_0(%arg0: i32, %arg1: i32) -> (i32, i32) {
    %c0_i32 = arith.constant 0 : i32
    return %arg0, %arg1 : i32, i32
  }
  func.func @transform_1(%arg0: i32, %arg1: i32) -> (i32, i32) {
    %c0_i32 = arith.constant 0 : i32
    %c0_i32_0 = arith.constant 0 : i32
    return %arg1, %c0_i32 : i32, i32
  }
  func.func @transform_2(%arg0: i32, %arg1: i32) -> (i32, i32) {
    %c0_i32 = arith.constant 0 : i32
    %c0_i32_0 = arith.constant 0 : i32
    return %arg0, %c0_i32 : i32, i32
  }
  func.func @transform_3(%arg0: i32, %arg1: i32) -> (i32, i32) {
    %c0_i32 = arith.constant 0 : i32
    %c0_i32_0 = arith.constant 0 : i32
    %c0_i32_1 = arith.constant 0 : i32
    return %c0_i32, %c0_i32_0 : i32, i32
  }
  func.func @transform_4(%arg0: i32, %arg1: i32) -> (i32, i32) {
    %c0_i32 = arith.constant 0 : i32
    %c0_i32_0 = arith.constant 0 : i32
    %c0_i32_1 = arith.constant 0 : i32
    return %c0_i32, %c0_i32_0 : i32, i32
  }
  func.func @transform_5(%arg0: i32, %arg1: i32) -> (i32, i32) {
    %c0_i32 = arith.constant 0 : i32
    %c0_i32_0 = arith.constant 0 : i32
    %c0_i32_1 = arith.constant 0 : i32
    return %c0_i32, %c0_i32_0 : i32, i32
  }
  func.func @transform_6(%arg0: i32, %arg1: i32) -> (i32, i32) {
    %c0_i32 = arith.constant 0 : i32
    %c0_i32_0 = arith.constant 0 : i32
    return %arg0, %c0_i32 : i32, i32
  }
}

</mosaic_0001>

<llo_original>
// kernel: tpu_custom_call.1
$region0: #{tpu_custom_call.1}
  #allocation0 [shape = 'u32[]', space=smem, size = 0x4, offset = 0x4, fixed_abs, tag = 'smem constant byte address 0x4 - core index']
  #allocation1 [shape = 'u32[144,128]{1,0:T(1,128)}', space=vmem, size = 0x12000, scoped, tag = 'internal scratch']
  #allocation2 [shape = 'f32[8,128]{1,0:T(8,128)}', space=vmem, size = 0x1000, scoped, tag = 'scratch operand']
  %s0 = inlined_call_operand.hbm [shape: bf16[8,8], index: 0, kind: input, shape index: {}]
  %s1 = inlined_call_operand.hbm [shape: bf16[8,128], index: 1, kind: input, shape index: {}]
  %s2 = inlined_call_operand.hbm [shape: bf16[8,128], index: 2, kind: input, shape index: {}]
  %s3 = inlined_call_operand.hbm [shape: f32[128,128], index: 3, kind: input, shape index: {}]
  %s4 = inlined_call_operand.hbm [shape: f32[128,128], index: 4, kind: input, shape index: {}]
  %s5 = inlined_call_operand.vmem [shape: f32[1,128], index: 5, kind: input, shape index: {}]
  %s6 = inlined_call_operand.hbm [shape: bf16[8,128], index: 6, kind: output, shape index: {}]
  %s7 = sld [smem:[#allocation0]]
  $region62: #{tpu_custom_call.1} parent=0
    _
  %s9 = ssub.s32 1, %s7
  %s10 = scalar_select 0, %s9, %s7
  $region1: #{tpu_custom_call.1} parent=0
    #allocation3 [shape = 'u8[2048]{0}', space=vmem, size = 0x800, scoped, tag = 'input window, operand 0, single buffered']
    #allocation4 [shape = 's32[1]{0}', space=sflag, size = 0x4, scoped, tag = 'scoped memory for tpu_custom_call.1']
    #allocation5 [shape = 's32[1]{0}', space=sflag, size = 0x4, scoped, tag = 'scoped memory for tpu_custom_call.1']
    #allocation6 [shape = 'u8[2048]{0}', space=vmem, size = 0x800, scoped, tag = 'input window, operand 1, single buffered']
    #allocation7 [shape = 's32[1]{0}', space=sflag, size = 0x4, scoped, tag = 'scoped memory for tpu_custom_call.1']
    #allocation8 [shape = 'u8[2048]{0}', space=vmem, size = 0x800, scoped, tag = 'input window, operand 2, single buffered']
    #allocation9 [shape = 'u8[65536]{0}', space=vmem, size = 0x10000, scoped, tag = 'input window, operand 3, single buffered']
    #allocation10 [shape = 's32[1]{0}', space=sflag, size = 0x4, scoped, tag = 'scoped memory for tpu_custom_call.1']
    #allocation11 [shape = 'u8[65536]{0}', space=vmem, size = 0x10000, scoped, tag = 'input window, operand 4, single buffered']
    #allocation12 [shape = 'u8[2048]{0}', space=vmem, size = 0x800, scoped, tag = 'output window, operand 0, single buffered']
    %11 = vsyncpa [#allocation4], 0
    %12 = vsyncpa [#allocation7], 0
    %13 = vsyncpa [#allocation10], 0
    %14 = vsyncpa [#allocation5], 0
    // Predicated region
    $region2: #{tpu_custom_call.1} parent=1 // pred_check
      _
    $region3: #{tpu_custom_call.1} parent=1 // pred_check_branch
      %16 = sbr.rel (0) target = $region5
    $region4: #{tpu_custom_call.1} parent=1 // pred_region
      %s18 = ssub.s32 64, 64
      %19 = vsyncadd [#allocation4], %s18
      %s21 = sshll.u32 [#allocation3], 4
      %s22 = int_to_ptr.vmem [resolvable:$true] %s21
      %24 = dma.hbm_to_vmem [thread:$0]  %s0, 64, %s22, [#allocation4]
    $region5: #{tpu_custom_call.1} parent=1 // pred_fallthru
      _
    // Predicated region
    $region6: #{tpu_custom_call.1} parent=1 // pred_check
      _
    $region7: #{tpu_custom_call.1} parent=1 // pred_check_branch
      %26 = sbr.rel (0) target = $region9
    $region8: #{tpu_custom_call.1} parent=1 // pred_region
      %s28 = ssub.s32 64, 64
      %29 = vsyncadd [#allocation7], %s28
      %s31 = sshll.u32 [#allocation6], 4
      %s32 = int_to_ptr.vmem [resolvable:$true] %s31
      %34 = dma.hbm_to_vmem [thread:$0]  %s1, 64, %s32, [#allocation7]
    $region9: #{tpu_custom_call.1} parent=1 // pred_fallthru
      _
    // Predicated region
    $region10: #{tpu_custom_call.1} parent=1 // pred_check
      _
    $region11: #{tpu_custom_call.1} parent=1 // pred_check_branch
      %36 = sbr.rel (0) target = $region13
    $region12: #{tpu_custom_call.1} parent=1 // pred_region
      %s38 = ssub.s32 64, 64
      %39 = vsyncadd [#allocation7], %s38
      %s41 = sshll.u32 [#allocation8], 4
      %s42 = int_to_ptr.vmem [resolvable:$true] %s41
      %44 = dma.hbm_to_vmem [thread:$0]  %s2, 64, %s42, [#allocation7]
    $region13: #{tpu_custom_call.1} parent=1 // pred_fallthru
      _
    // Predicated region
    $region14: #{tpu_custom_call.1} parent=1 // pred_check
      _
    $region15: #{tpu_custom_call.1} parent=1 // pred_check_branch
      %46 = sbr.rel (0) target = $region17
    $region16: #{tpu_custom_call.1} parent=1 // pred_region
      %s48 = ssub.s32 2048, 2048
      %49 = vsyncadd [#allocation10], %s48
      %s50 = sshll.u32 [#allocation9], 4
      %s51 = int_to_ptr.vmem [resolvable:$true] %s50
      %56 = dma.hbm_to_vmem [thread:$0]  %s3, 2048, %s51, [#allocation10], 128, 128, 8
    $region17: #{tpu_custom_call.1} parent=1 // pred_fallthru
      _
    // Predicated region
    $region18: #{tpu_custom_call.1} parent=1 // pred_check
      _
    $region19: #{tpu_custom_call.1} parent=1 // pred_check_branch
      %58 = sbr.rel (0) target = $region21
    $region20: #{tpu_custom_call.1} parent=1 // pred_region
      %s60 = ssub.s32 2048, 2048
      %61 = vsyncadd [#allocation10], %s60
      %s62 = sshll.u32 [#allocation11], 4
      %s63 = int_to_ptr.vmem [resolvable:$true] %s62
      %68 = dma.hbm_to_vmem [thread:$0]  %s4, 2048, %s63, [#allocation10], 128, 128, 8
    $region21: #{tpu_custom_call.1} parent=1 // pred_fallthru
      _
    // Predicated region
    $region22: #{tpu_custom_call.1} parent=1 // pred_check
      _
    $region23: #{tpu_custom_call.1} parent=1 // pred_check_branch
      %70 = sbr.rel (0) target = $region25
    $region24: #{tpu_custom_call.1} parent=1 // pred_region
      _
    $region25: #{tpu_custom_call.1} parent=1 // pred_fallthru
      _
    // Predicated region
    $region26: #{tpu_custom_call.1} parent=1 // pred_check
      _
    $region27: #{tpu_custom_call.1} parent=1 // pred_check_branch
      %72 = sbr.rel (0) target = $region29
    $region28: #{tpu_custom_call.1} parent=1 // pred_region
      %73 = dma.done [#allocation4], 64
    $region29: #{tpu_custom_call.1} parent=1 // pred_fallthru
      _
    // Predicated region
    $region30: #{tpu_custom_call.1} parent=1 // pred_check
      _
    $region31: #{tpu_custom_call.1} parent=1 // pred_check_branch
      %75 = sbr.rel (0) target = $region33
    $region32: #{tpu_custom_call.1} parent=1 // pred_region
      %76 = dma.done [#allocation7], 64
    $region33: #{tpu_custom_call.1} parent=1 // pred_fallthru
      _
    // Predicated region
    $region34: #{tpu_custom_call.1} parent=1 // pred_check
      _
    $region35: #{tpu_custom_call.1} parent=1 // pred_check_branch
      %78 = sbr.rel (0) target = $region37
    $region36: #{tpu_custom_call.1} parent=1 // pred_region
      %79 = dma.done [#allocation7], 64
    $region37: #{tpu_custom_call.1} parent=1 // pred_fallthru
      _
    // Predicated region
    $region38: #{tpu_custom_call.1} parent=1 // pred_check
      _
    $region39: #{tpu_custom_call.1} parent=1 // pred_check_branch
      %81 = sbr.rel (0) target = $region41
    $region40: #{tpu_custom_call.1} parent=1 // pred_region
      %82 = dma.done [#allocation10], 2048
    $region41: #{tpu_custom_call.1} parent=1 // pred_fallthru
      _
    // Predicated region
    $region42: #{tpu_custom_call.1} parent=1 // pred_check
      _
    $region43: #{tpu_custom_call.1} parent=1 // pred_check_branch
      %84 = sbr.rel (0) target = $region45
    $region44: #{tpu_custom_call.1} parent=1 // pred_region
      %85 = dma.done [#allocation10], 2048
    $region45: #{tpu_custom_call.1} parent=1 // pred_fallthru
      _
    %p87 = scmp.eq.s32.totalorder 0, 0
    // Predicated region
    $region46: #{tpu_custom_call.1} parent=1 // pred_check
      %p88 = pneg %p87
    $region47: #{tpu_custom_call.1} parent=1 // pred_check_branch
      %90 = sbr.rel (%p88) target = $region49
    $region48: #{tpu_custom_call.1} parent=1 // pred_region
      %91 = vst [vmem:[#allocation2] sm:$0xff] 0.0
    $region49: #{tpu_custom_call.1} parent=1 // pred_fallthru
      _
    %v92 = vld [vmem:[#allocation2] sm:$0xff]
    %v93 = vld [vmem:[#allocation3] sm:$0xf]
    %v94 = vld [vmem:[#allocation6] sm:$0xf]
    %vm95 = vcmask 64512
    %v97 = vsel %vm95, %v93, 0
    %vm99 = vcmask 1043456
    %v101 = vsel %vm99, %v94, 0
    %103 = vmatprep.subr.bf16.mxu0 0
    %104 = vmatpush1.bf16.msra.mxu0 0
    %105 = vmatprep.subr.bf16.mxu0 0
    %106 = vmatpush1.bf16.msra.mxu0 0
    %107 = vmatprep.subr.bf16.mxu0 0
    %108 = vmatpush1.bf16.msra.mxu0 0
    %109 = vmatprep.subr.bf16.mxu0 0
    %110 = vmatpush1.bf16.msra.mxu0 0
    %111 = vmatprep.subr.bf16.mxu0 0
    %112 = vmatpush1.bf16.msra.mxu0 0
    %113 = vmatprep.subr.bf16.mxu0 0
    %114 = vmatpush1.bf16.msra.mxu0 0
    %115 = vmatprep.subr.bf16.mxu0 0
    %116 = vmatpush1.bf16.msra.mxu0 0
    %117 = vmatprep.subr.bf16.mxu0 0
    %118 = vmatpush1.bf16.msra.mxu0 %v101
    %119 = vmatprep.subr.bf16.mxu0 0
    %120 = vmatpush2.bf16.msra.mxu0 0
    %121 = vmatprep.subr.bf16.mxu0 0
    %122 = vmatpush2.bf16.msra.mxu0 0
    %123 = vmatprep.subr.bf16.mxu0 0
    %124 = vmatpush2.bf16.msra.mxu0 0
    %125 = vmatprep.subr.bf16.mxu0 0
    %126 = vmatpush2.bf16.msra.mxu0 0
    %127 = vmatprep.subr.bf16.mxu0 0
    %128 = vmatpush2.bf16.msra.mxu0 0
    %129 = vmatprep.subr.bf16.mxu0 0
    %130 = vmatpush2.bf16.msra.mxu0 0
    %131 = vmatprep.subr.bf16.mxu0 0
    %132 = vmatpush2.bf16.msra.mxu0 0
    %133 = vmatprep.subr.bf16.mxu0 0
    %134 = vmatpush2.bf16.msra.mxu0 0
    %135 = vmatprep.mubr.bf16.mxu0 0
    %136 = vmatmul.mubr.bf16.gmra.mxu0 %v97
    %v137 = vpop.f32.mrf.mxu0
    %v138 = vadd.f32 0.0, %v137
    %v139 = vpop.f32.mrf.mxu0
    %v140 = vpop.f32.mrf.mxu0
    %v141 = vpop.f32.mrf.mxu0
    %142 = vdwg.mxu0
    %v143 = vadd.f32 %v92, %v138
    %144 = vst [vmem:[#allocation2] sm:$0xff] %v143
    // Predicated region
    $region50: #{tpu_custom_call.1} parent=1 // pred_check
      %p145 = pneg %p87
    $region51: #{tpu_custom_call.1} parent=1 // pred_check_branch
      %147 = sbr.rel (%p145) target = $region53
    $region52: #{tpu_custom_call.1} parent=1 // pred_region
      %v148 = vld [vmem:[#allocation2] sm:$0xff]
      %v149 = vld [vmem:[#allocation9] sm:$0xff]
      %v150 = vld [vmem:[#allocation9 + $0x8] sm:$0xff]
      %v151 = vld [vmem:[#allocation9 + $0x10] sm:$0xff]
      %v152 = vld [vmem:[#allocation9 + $0x18] sm:$0xff]
      %v153 = vld [vmem:[#allocation9 + $0x20] sm:$0xff]
      %v154 = vld [vmem:[#allocation9 + $0x28] sm:$0xff]
      %v155 = vld [vmem:[#allocation9 + $0x30] sm:$0xff]
      %v156 = vld [vmem:[#allocation9 + $0x38] sm:$0xff]
      %v157 = vld [vmem:[#allocation9 + $0x40] sm:$0xff]
      %v158 = vld [vmem:[#allocation9 + $0x48] sm:$0xff]
      %v159 = vld [vmem:[#allocation9 + $0x50] sm:$0xff]
      %v160 = vld [vmem:[#allocation9 + $0x58] sm:$0xff]
      %v161 = vld [vmem:[#allocation9 + $0x60] sm:$0xff]
      %v162 = vld [vmem:[#allocation9 + $0x68] sm:$0xff]
      %v163 = vld [vmem:[#allocation9 + $0x70] sm:$0xff]
      %v164 = vld [vmem:[#allocation9 + $0x78] sm:$0xff]
      %v165 = vld [vmem:[#allocation8] sm:$0xf]
      %v166 = vunpack.c.l.bf16 %v165
      %v167 = vld [vmem:[#allocation11] sm:$0xff]
      %v168 = vld [vmem:[#allocation11 + $0x8] sm:$0xff]
      %v169 = vld [vmem:[#allocation11 + $0x10] sm:$0xff]
      %v170 = vld [vmem:[#allocation11 + $0x18] sm:$0xff]
      %v171 = vld [vmem:[#allocation11 + $0x20] sm:$0xff]
      %v172 = vld [vmem:[#allocation11 + $0x28] sm:$0xff]
      %v173 = vld [vmem:[#allocation11 + $0x30] sm:$0xff]
      %v174 = vld [vmem:[#allocation11 + $0x38] sm:$0xff]
      %v175 = vld [vmem:[#allocation11 + $0x40] sm:$0xff]
      %v176 = vld [vmem:[#allocation11 + $0x48] sm:$0xff]
      %v177 = vld [vmem:[#allocation11 + $0x50] sm:$0xff]
      %v178 = vld [vmem:[#allocation11 + $0x58] sm:$0xff]
      %v179 = vld [vmem:[#allocation11 + $0x60] sm:$0xff]
      %v180 = vld [vmem:[#allocation11 + $0x68] sm:$0xff]
      %v181 = vld [vmem:[#allocation11 + $0x70] sm:$0xff]
      %v182 = vld [vmem:[#allocation11 + $0x78] sm:$0xff]
      %183 = vmatprep.subr.mxu0 0.0
      %184 = vmatpush1.msra.mxu0 %v182
      %185 = vmatprep.subr.mxu0 0.0
      %186 = vmatpush1.msra.mxu0 %v181
      %187 = vmatprep.subr.mxu0 0.0
      %188 = vmatpush1.msra.mxu0 %v180
      %189 = vmatprep.subr.mxu0 0.0
      %190 = vmatpush1.msra.mxu0 %v179
      %191 = vmatprep.subr.mxu0 0.0
      %192 = vmatpush1.msra.mxu0 %v178
      %193 = vmatprep.subr.mxu0 0.0
      %194 = vmatpush1.msra.mxu0 %v177
      %195 = vmatprep.subr.mxu0 0.0
      %196 = vmatpush1.msra.mxu0 %v176
      %197 = vmatprep.subr.mxu0 0.0
      %198 = vmatpush1.msra.mxu0 %v175
      %199 = vmatprep.subr.mxu0 0.0
      %200 = vmatpush1.msra.mxu0 %v174
      %201 = vmatprep.subr.mxu0 0.0
      %202 = vmatpush1.msra.mxu0 %v173
      %203 = vmatprep.subr.mxu0 0.0
      %204 = vmatpush1.msra.mxu0 %v172
      %205 = vmatprep.subr.mxu0 0.0
      %206 = vmatpush1.msra.mxu0 %v171
      %207 = vmatprep.subr.mxu0 0.0
      %208 = vmatpush1.msra.mxu0 %v170
      %209 = vmatprep.subr.mxu0 0.0
      %210 = vmatpush1.msra.mxu0 %v169
      %211 = vmatprep.subr.mxu0 0.0
      %212 = vmatpush1.msra.mxu0 %v168
      %213 = vmatprep.subr.mxu0 0.0
      %214 = vmatpush1.msra.mxu0 %v167
      %215 = vmatprep.subr.mxu0 0.0
      %216 = vmatpush2.msra.mxu0 0.0
      %217 = vmatprep.subr.mxu0 0.0
      %218 = vmatpush2.msra.mxu0 0.0
      %219 = vmatprep.subr.mxu0 0.0
      %220 = vmatpush2.msra.mxu0 0.0
      %221 = vmatprep.subr.mxu0 0.0
      %222 = vmatpush2.msra.mxu0 0.0
      %223 = vmatprep.subr.mxu0 0.0
      %224 = vmatpush2.msra.mxu0 0.0
      %225 = vmatprep.subr.mxu0 0.0
      %226 = vmatpush2.msra.mxu0 0.0
      %227 = vmatprep.subr.mxu0 0.0
      %228 = vmatpush2.msra.mxu0 0.0
      %229 = vmatprep.subr.mxu0 0.0
      %230 = vmatpush2.msra.mxu0 0.0
      %231 = vmatprep.subr.mxu0 0.0
      %232 = vmatpush2.msra.mxu0 0.0
      %233 = vmatprep.subr.mxu0 0.0
      %234 = vmatpush2.msra.mxu0 0.0
      %235 = vmatprep.subr.mxu0 0.0
      %236 = vmatpush2.msra.mxu0 0.0
      %237 = vmatprep.subr.mxu0 0.0
      %238 = vmatpush2.msra.mxu0 0.0
      %239 = vmatprep.subr.mxu0 0.0
      %240 = vmatpush2.msra.mxu0 0.0
      %241 = vmatprep.subr.mxu0 0.0
      %242 = vmatpush2.msra.mxu0 0.0
      %243 = vmatprep.subr.mxu0 0.0
      %244 = vmatpush2.msra.mxu0 0.0
      %245 = vmatprep.subr.mxu0 0.0
      %246 = vmatpush2.msra.mxu0 0.0
      %247 = vmatprep.mubr.f32.mxu0 0.0
      %248 = vmatmul.mubr.f32.gmra.mxu0 %v166
      %v249 = vpop.f32.mrf.mxu0
      %v250 = vadd.f32 0.0, %v249
      %v251 = vpop.f32.mrf.mxu0
      %252 = vdwg.mxu0
      %253 = vmatprep.subr.mxu0 0.0
      %254 = vmatpush1.msra.mxu0 %v164
      %255 = vmatprep.subr.mxu0 0.0
      %256 = vmatpush1.msra.mxu0 %v163
      %257 = vmatprep.subr.mxu0 0.0
      %258 = vmatpush1.msra.mxu0 %v162
      %259 = vmatprep.subr.mxu0 0.0
      %260 = vmatpush1.msra.mxu0 %v161
      %261 = vmatprep.subr.mxu0 0.0
      %262 = vmatpush1.msra.mxu0 %v160
      %263 = vmatprep.subr.mxu0 0.0
      %264 = vmatpush1.msra.mxu0 %v159
      %265 = vmatprep.subr.mxu0 0.0
      %266 = vmatpush1.msra.mxu0 %v158
      %267 = vmatprep.subr.mxu0 0.0
      %268 = vmatpush1.msra.mxu0 %v157
      %269 = vmatprep.subr.mxu0 0.0
      %270 = vmatpush1.msra.mxu0 %v156
      %271 = vmatprep.subr.mxu0 0.0
      %272 = vmatpush1.msra.mxu0 %v155
      %273 = vmatprep.subr.mxu0 0.0
      %274 = vmatpush1.msra.mxu0 %v154
      %275 = vmatprep.subr.mxu0 0.0
      %276 = vmatpush1.msra.mxu0 %v153
      %277 = vmatprep.subr.mxu0 0.0
      %278 = vmatpush1.msra.mxu0 %v152
      %279 = vmatprep.subr.mxu0 0.0
      %280 = vmatpush1.msra.mxu0 %v151
      %281 = vmatprep.subr.mxu0 0.0
      %282 = vmatpush1.msra.mxu0 %v150
      %283 = vmatprep.subr.mxu0 0.0
      %284 = vmatpush1.msra.mxu0 %v149
      %285 = vmatprep.subr.mxu0 0.0
      %286 = vmatpush2.msra.mxu0 0.0
      %287 = vmatprep.subr.mxu0 0.0
      %288 = vmatpush2.msra.mxu0 0.0
      %289 = vmatprep.subr.mxu0 0.0
      %290 = vmatpush2.msra.mxu0 0.0
      %291 = vmatprep.subr.mxu0 0.0
      %292 = vmatpush2.msra.mxu0 0.0
      %293 = vmatprep.subr.mxu0 0.0
      %294 = vmatpush2.msra.mxu0 0.0
      %295 = vmatprep.subr.mxu0 0.0
      %296 = vmatpush2.msra.mxu0 0.0
      %297 = vmatprep.subr.mxu0 0.0
      %298 = vmatpush2.msra.mxu0 0.0
      %299 = vmatprep.subr.mxu0 0.0
      %300 = vmatpush2.msra.mxu0 0.0
      %301 = vmatprep.subr.mxu0 0.0
      %302 = vmatpush2.msra.mxu0 0.0
      %303 = vmatprep.subr.mxu0 0.0
      %304 = vmatpush2.msra.mxu0 0.0
      %305 = vmatprep.subr.mxu0 0.0
      %306 = vmatpush2.msra.mxu0 0.0
      %307 = vmatprep.subr.mxu0 0.0
      %308 = vmatpush2.msra.mxu0 0.0
      %309 = vmatprep.subr.mxu0 0.0
      %310 = vmatpush2.msra.mxu0 0.0
      %311 = vmatprep.subr.mxu0 0.0
      %312 = vmatpush2.msra.mxu0 0.0
      %313 = vmatprep.subr.mxu0 0.0
      %314 = vmatpush2.msra.mxu0 0.0
      %315 = vmatprep.subr.mxu0 0.0
      %316 = vmatpush2.msra.mxu0 0.0
      %317 = vmatprep.mubr.f32.mxu0 0.0
      %318 = vmatmul.mubr.f32.gmra.mxu0 %v148
      %v319 = vpop.f32.mrf.mxu0
      %v320 = vadd.f32 %v250, %v319
      %v321 = vpop.f32.mrf.mxu0
      %322 = vdwg.mxu0
      %v323 = vld [vmem:[%s5] sm:$0x1]
      %v325 = vlaneseq
      %v326 = vshrl.u32 %v325, 7
      %v327 = vsub.s32 0, %v326
      %v328 = vrot.slane %v323, %v327
      %v330 = vadd.f32 %v320, %v328
      %v331 = vmax.f32 %v330, 0.0
      %v332 = vpack.c.bf16 %v331, %v331
      %333 = vst [vmem:[#allocation12] sm:$0xf] %v332
    $region53: #{tpu_custom_call.1} parent=1 // pred_fallthru
      _
    // Predicated region
    $region54: #{tpu_custom_call.1} parent=1 // pred_check
      _
    $region55: #{tpu_custom_call.1} parent=1 // pred_check_branch
      %335 = sbr.rel (0) target = $region57
    $region56: #{tpu_custom_call.1} parent=1 // pred_region
      %s337 = ssub.s32 64, 64
      %338 = vsyncadd [#allocation5], %s337
      %s340 = sshll.u32 [#allocation12], 4
      %s341 = int_to_ptr.vmem [resolvable:$true] %s340
      %343 = dma.vmem_to_hbm [thread:$0]  %s341, 64, %s6, [#allocation5]
    $region57: #{tpu_custom_call.1} parent=1 // pred_fallthru
      _
    // Predicated region
    $region58: #{tpu_custom_call.1} parent=1 // pred_check
      _
    $region59: #{tpu_custom_call.1} parent=1 // pred_check_branch
      %345 = sbr.rel (0) target = $region61
    $region60: #{tpu_custom_call.1} parent=1 // pred_region
      %346 = dma.done [#allocation5], 64
    $region61: #{tpu_custom_call.1} parent=1 // pred_fallthru
      _
    %347 = vsyncpa [#allocation4], 1
    %348 = vsyncpa [#allocation7], 1
    %349 = vsyncpa [#allocation10], 1
    %350 = vsyncpa [#allocation5], 1

</llo_original>
